<compile_context>
chip_gen: v5e
topology: v5e:2x2
jax: 0.10.0
libtpu: 0.0.40
codegen_flags: <defaults>
</compile_context>

<pallas_src>
import jax
import jax.numpy as jnp
from jax.experimental import pallas as pl
from jax.experimental.pallas import tpu as pltpu


def _planar_kernel(wb_ref, sel_ref, u_ref, s_ref, z_ref, x_ref, ldj_ref):
    """One (tile_rows, L) packed batch tile (L = P*dim lanes, P samples/row).

    wb_ref  : (L, P)   block-diagonal w (per-sample segmented reduce)  VMEM
    sel_ref : (P, L)   one-hot segment selector (broadcast tanh back)  VMEM
    u_ref   : (1, L)   u_hat tiled P times across lanes                VMEM
    s_ref   : (2,)     [b, w . u_hat] scalars                          SMEM
    z_ref   : (T, L)   packed input samples                            VMEM
    x_ref   : (T, L)   packed transformed samples                      VMEM
    ldj_ref : (T, P)   packed log|det J| (float32)                     VMEM
    """
    z = z_ref[...].astype(jnp.float32)
    b = s_ref[0]
    wu = s_ref[1]

    # Per-sample affine = z . w + b, done as one MXU matmul against the
    # block-diagonal weight matrix -> (T, P), one column per packed sample.
    affine = jnp.dot(z, wb_ref[...], preferred_element_type=jnp.float32) + b
    t = jnp.tanh(affine)                                   # (T, P)

    # Broadcast each sample's tanh back to its 32-lane segment (exact:
    # multiply by a 0/1 selector), then elementwise update.
    t_bcast = jnp.dot(t, sel_ref[...], preferred_element_type=jnp.float32)
    x_ref[...] = (z + u_ref[...] * t_bcast).astype(x_ref.dtype)

    # det_grad = 1 + (1 - tanh^2) * (w . u_hat)   -- no (N, dim) psi needed.
    det_grad = 1.0 + (1.0 - t * t) * wu                    # (T, P)
    ldj_ref[...] = jnp.log(jnp.abs(det_grad) + 1e-8).astype(ldj_ref.dtype)


def _u_hat_cal(u, w):
    """Parameter reparameterization (matches Planar_flow.u_hat_cal).

    Numerically-stable softplus; keeps the division by ||w||_2 exactly as in
    the given PyTorch (torch.pow(torch.norm(w), 1)).
    """
    w_dot_u = jnp.sum(u * w)
    m = -1.0 + jax.nn.softplus(w_dot_u)
    return u + (m - w_dot_u) * w / jnp.linalg.norm(w)


def _select_tile_rows(rows, target_rows):
    """Pick a packed-row tile: big for overhead amortization, multiple of 8,
    and >= 2 grid steps for large batches (v7x megacore)."""
    if rows > target_rows:
        return target_rows                       # multiple of 8 -> >= 2 tiles
    if rows >= 1024:
        half = pl.cdiv(rows, 2)
        return pl.cdiv(half, 8) * 8              # split across 2 TensorCores
    return rows                                  # single block == full extent


def planar_flow(z, u, w, b, *, tile_samples=16384):
    """z: (N, dim); u, w: (1, dim); b: scalar.  Returns (x, LDJ).

    x has z.dtype and shape (N, dim); LDJ is float32 of shape (N, 1).
    """
    N, dim = z.shape

    # --- parameter setup in plain JAX (O(dim)) ------------------------------
    w_f32 = w.astype(jnp.float32).reshape(1, dim)
    u_f32 = u.astype(jnp.float32).reshape(1, dim)
    u_hat = _u_hat_cal(u_f32, w_f32)
    wu = jnp.sum(w_f32 * u_hat)                            # scalar w . u_hat
    scalars = jnp.stack(
        [jnp.asarray(b, jnp.float32).reshape(()), wu]
    ).astype(jnp.float32)                                  # (2,) for SMEM

    # --- lane-dense packing: P samples per 128-lane row ---------------------
    P = (128 // dim) if (dim < 128 and 128 % dim == 0) else 1
    L = P * dim

    sel = jnp.repeat(jnp.eye(P, dtype=jnp.float32), dim, axis=1)   # (P, L)
    w_tiled = jnp.tile(w_f32, (1, P))                              # (1, L)
    u_tiled = jnp.tile(u_hat, (1, P))                              # (1, L)
    w_block = (sel * w_tiled).T                                    # (L, P)

    # Pad only up to a multiple of P (at most P-1 rows); the packed reshape
    # of the contiguous (n_pad, dim) buffer into (rows, L) is layout-free.
    n_pad = pl.cdiv(N, P) * P
    z_in = jnp.pad(z, ((0, n_pad - N), (0, 0))) if n_pad != N else z
    rows = n_pad // P
    z_packed = z_in.reshape(rows, L)

    # --- tile selection ------------------------------------------------------
    target_rows = max(8, ((tile_samples // P) // 8) * 8)
    tile_rows = _select_tile_rows(rows, target_rows)
    num_tiles = pl.cdiv(rows, tile_rows)        # edge block masked by Pallas

    itemsize = jnp.dtype(z.dtype).itemsize
    cost = pl.CostEstimate(
        flops=4 * n_pad * dim * P + 4 * n_pad * dim,
        transcendentals=2 * n_pad,
        bytes_accessed=2 * rows * L * itemsize + rows * P * 4,
    )

    x_packed, ldj_packed = pl.pallas_call(
        _planar_kernel,
        grid=(num_tiles,),
        out_shape=(
            jax.ShapeDtypeStruct((rows, L), z.dtype),
            jax.ShapeDtypeStruct((rows, P), jnp.float32),
        ),
        in_specs=[
            pl.BlockSpec((L, P), lambda i: (0, 0)),        # block-diag w
            pl.BlockSpec((P, L), lambda i: (0, 0)),        # segment selector
            pl.BlockSpec((1, L), lambda i: (0, 0)),        # tiled u_hat
            pl.BlockSpec(memory_space=pltpu.MemorySpace.SMEM),  # [b, wu]
            pl.BlockSpec((tile_rows, L), lambda i: (i, 0)),     # z tile
        ],
        out_specs=(
            pl.BlockSpec((tile_rows, L), lambda i: (i, 0)),     # x tile
            pl.BlockSpec((tile_rows, P), lambda i: (i, 0)),     # ldj tile
        ),
        compiler_params=pltpu.CompilerParams(
            dimension_semantics=("parallel",),
        ),
        cost_estimate=cost,
    )(w_block, sel, u_tiled, scalars, z_packed)

    # Un-pack (free contiguous reshapes); the slice is a no-op when N % P == 0.
    x = x_packed.reshape(n_pad, dim)[:N]
    ldj = ldj_packed.reshape(n_pad, 1)[:N]
    return x, ldj


def _reference(z, u, w, b):
    """Pure-JAX reference mirroring the PyTorch forward, for validation."""
    u_hat = _u_hat_cal(u, w)
    affine = z @ w.T + b
    x = z + u_hat * jnp.tanh(affine)
    psi = (1.0 - jnp.tanh(affine) ** 2) * w
    det_grad = 1.0 + psi @ u_hat.T
    return x, jnp.log(jnp.abs(det_grad) + 1e-8)


if __name__ == "__main__":
    key = jax.random.PRNGKey(0)
    k_u, k_w, k_b, k_z = jax.random.split(key, 4)

    dim = 32
    u = jax.random.normal(k_u, (1, dim), jnp.float32) * 0.01
    w = jax.random.normal(k_w, (1, dim), jnp.float32) * 0.01
    b = jax.random.normal(k_b, (), jnp.float32) * 0.01

    # --- small batch (single block) -----------------------------------------
    N = 8
    z = jax.random.normal(k_z, (N, dim), jnp.float32)
    x, ldj = planar_flow(z, u, w, b)
    jax.block_until_ready((x, ldj))
    x_ref, ldj_ref = _reference(z, u, w, b)
    assert x.shape == (N, dim) and ldj.shape == (N, 1)
    assert jnp.allclose(x, x_ref, atol=1e-5, rtol=1e-5)
    assert jnp.allclose(ldj, ldj_ref, atol=1e-5, rtol=1e-5)

    # --- batch not a multiple of the packing factor, multi-tile grid with a
    #     partial final block (exercises pad + Pallas edge-block masking) ----
    N2 = 1101
    z2 = jax.random.normal(jax.random.PRNGKey(1), (N2, dim), jnp.float32)
    x2, ldj2 = planar_flow(z2, u, w, b, tile_samples=256)
    jax.block_until_ready((x2, ldj2))
    x2_ref, ldj2_ref = _reference(z2, u, w, b)
    assert x2.shape == (N2, dim) and ldj2.shape == (N2, 1)
    assert jnp.allclose(x2, x2_ref, atol=1e-5, rtol=1e-5)
    assert jnp.allclose(ldj2, ldj2_ref, atol=1e-5, rtol=1e-5)

    print("KERNEL_OK")
</pallas_src>

<mosaic_0001>
module attributes {stable_mosaic.version = 11 : i64} {
  func.func @_planar_kernel(%arg0: i32, %arg1: memref<128x4xf32, #tpu.memory_space<vmem>>, %arg2: memref<4x128xf32, #tpu.memory_space<vmem>>, %arg3: memref<1x128xf32, #tpu.memory_space<vmem>>, %arg4: memref<2xf32, #tpu.memory_space<smem>>, %arg5: memref<2x128xf32, #tpu.memory_space<vmem>>, %arg6: memref<2x128xf32, #tpu.memory_space<vmem>>, %arg7: memref<2x4xf32, #tpu.memory_space<vmem>>) attributes {dimension_semantics = [#tpu.dimension_semantics<parallel>], iteration_bounds = array<i64: 1>, scalar_prefetch = 0 : i64, scratch_operands = 0 : i64, tpu.core_type = #tpu.core_type<tc>, window_params = [{pipeline_mode = #tpu.pipeline_mode<synchronous>, transform_indices = @transform_0, window_bounds = array<i64: 128, 4>}, {pipeline_mode = #tpu.pipeline_mode<synchronous>, transform_indices = @transform_1, window_bounds = array<i64: 4, 128>}, {pipeline_mode = #tpu.pipeline_mode<synchronous>, transform_indices = @transform_2, window_bounds = array<i64: 1, 128>}, {transform_indices = @transform_3, window_bounds = array<i64: 2>}, {transform_indices = @transform_4, window_bounds = array<i64: 2, 128>}, {transform_indices = @transform_5, window_bounds = array<i64: 2, 128>}, {transform_indices = @transform_6, window_bounds = array<i64: 2, 4>}]} {
    %c0 = arith.constant 0 : index
    %c0_0 = arith.constant 0 : index
    %0 = vector.load %arg5[%c0, %c0_0] : memref<2x128xf32, #tpu.memory_space<vmem>>, vector<2x128xf32>
    %c0_1 = arith.constant 0 : index
    %1 = memref.load %arg4[%c0_1] : memref<2xf32, #tpu.memory_space<smem>>
    %c1 = arith.constant 1 : index
    %2 = memref.load %arg4[%c1] : memref<2xf32, #tpu.memory_space<smem>>
    %c0_2 = arith.constant 0 : index
    %c0_3 = arith.constant 0 : index
    %3 = vector.load %arg1[%c0_2, %c0_3] : memref<128x4xf32, #tpu.memory_space<vmem>>, vector<128x4xf32>
    %cst = arith.constant dense<0.000000e+00> : vector<2x4xf32>
    %4 = tpu.matmul %0, %3, %cst {dimension_numbers = #tpu.dot_dimension_numbers<[1], [0], [0], [1], [0, 0, 1, 1], [], []>} : vector<2x128xf32>, vector<128x4xf32>, vector<2x4xf32> -> vector<2x4xf32>
    %5 = vector.broadcast %1 : f32 to vector<2x4xf32>
    %6 = arith.addf %4, %5 : vector<2x4xf32>
    %7 = math.tanh %6 : vector<2x4xf32>
    %c0_4 = arith.constant 0 : index
    %c0_5 = arith.constant 0 : index
    %8 = vector.load %arg2[%c0_4, %c0_5] : memref<4x128xf32, #tpu.memory_space<vmem>>, vector<4x128xf32>
    %cst_6 = arith.constant dense<0.000000e+00> : vector<2x128xf32>
    %9 = tpu.matmul %7, %8, %cst_6 {dimension_numbers = #tpu.dot_dimension_numbers<[1], [0], [0], [1], [0, 0, 1, 1], [], []>} : vector<2x4xf32>, vector<4x128xf32>, vector<2x128xf32> -> vector<2x128xf32>
    %c0_7 = arith.constant 0 : index
    %c0_8 = arith.constant 0 : index
    %10 = vector.load %arg3[%c0_7, %c0_8] : memref<1x128xf32, #tpu.memory_space<vmem>>, vector<1x128xf32>
    %11 = vector.broadcast %10 : vector<1x128xf32> to vector<2x128xf32>
    %12 = arith.mulf %11, %9 : vector<2x128xf32>
    %13 = arith.addf %0, %12 : vector<2x128xf32>
    %c0_9 = arith.constant 0 : index
    %c0_10 = arith.constant 0 : index
    %14 = vector.load %arg6[%c0_9, %c0_10] : memref<2x128xf32, #tpu.memory_space<vmem>>, vector<2x128xf32>
    tpu.vector_store %arg6[%c0_9, %c0_10], %13 {strides = array<i32>} : memref<2x128xf32, #tpu.memory_space<vmem>>, vector<2x128xf32>,
    %15 = arith.mulf %7, %7 : vector<2x4xf32>
    %cst_11 = arith.constant 1.000000e+00 : f32
    %16 = vector.broadcast %cst_11 : f32 to vector<2x4xf32>
    %17 = arith.subf %16, %15 : vector<2x4xf32>
    %18 = vector.broadcast %2 : f32 to vector<2x4xf32>
    %19 = arith.mulf %17, %18 : vector<2x4xf32>
    %cst_12 = arith.constant 1.000000e+00 : f32
    %20 = vector.broadcast %cst_12 : f32 to vector<2x4xf32>
    %21 = arith.addf %20, %19 : vector<2x4xf32>
    %22 = math.absf %21 : vector<2x4xf32>
    %cst_13 = arith.constant 9.99999993E-9 : f32
    %23 = vector.broadcast %cst_13 : f32 to vector<2x4xf32>
    %24 = arith.addf %22, %23 : vector<2x4xf32>
    %25 = math.log %24 : vector<2x4xf32>
    %c0_14 = arith.constant 0 : index
    %c0_15 = arith.constant 0 : index
    %26 = vector.load %arg7[%c0_14, %c0_15] : memref<2x4xf32, #tpu.memory_space<vmem>>, vector<2x4xf32>
    tpu.vector_store %arg7[%c0_14, %c0_15], %25 {strides = array<i32>} : memref<2x4xf32, #tpu.memory_space<vmem>>, vector<2x4xf32>,
    return
  }
  func.func @transform_0(%arg0: i32) -> (i32, i32) {
    %c0_i32 = arith.constant 0 : i32
    %c0_i32_0 = arith.constant 0 : i32
    %c0_i32_1 = arith.constant 0 : i32
    return %c0_i32, %c0_i32_0 : i32, i32
  }
  func.func @transform_1(%arg0: i32) -> (i32, i32) {
    %c0_i32 = arith.constant 0 : i32
    %c0_i32_0 = arith.constant 0 : i32
    %c0_i32_1 = arith.constant 0 : i32
    return %c0_i32, %c0_i32_0 : i32, i32
  }
  func.func @transform_2(%arg0: i32) -> (i32, i32) {
    %c0_i32 = arith.constant 0 : i32
    %c0_i32_0 = arith.constant 0 : i32
    %c0_i32_1 = arith.constant 0 : i32
    return %c0_i32, %c0_i32_0 : i32, i32
  }
  func.func @transform_3(%arg0: i32) -> i32 {
    %c0_i32 = arith.constant 0 : i32
    %c0_i32_0 = arith.constant 0 : i32
    return %c0_i32 : i32
  }
  func.func @transform_4(%arg0: i32) -> (i32, i32) {
    %c0_i32 = arith.constant 0 : i32
    %c0_i32_0 = arith.constant 0 : i32
    return %arg0, %c0_i32 : i32, i32
  }
  func.func @transform_5(%arg0: i32) -> (i32, i32) {
    %c0_i32 = arith.constant 0 : i32
    %c0_i32_0 = arith.constant 0 : i32
    return %arg0, %c0_i32 : i32, i32
  }
  func.func @transform_6(%arg0: i32) -> (i32, i32) {
    %c0_i32 = arith.constant 0 : i32
    %c0_i32_0 = arith.constant 0 : i32
    return %arg0, %c0_i32 : i32, i32
  }
}

</mosaic_0001>

<llo_original>
// kernel: tpu_custom_call.1
$region0: #{tpu_custom_call.1}
  #allocation0 [shape = 'u32[]', space=smem, size = 0x4, offset = 0x4, fixed_abs, tag = 'smem constant byte address 0x4 - core index']
  #allocation1 [shape = 'u32[72,128]{1,0:T(1,128)}', space=vmem, size = 0x9000, scoped, tag = 'internal scratch']
  %s0 = inlined_call_operand.vmem [shape: f32[128,4], index: 0, kind: input, shape index: {}]
  %s1 = inlined_call_operand.vmem [shape: f32[4,128], index: 1, kind: input, shape index: {}]
  %s2 = inlined_call_operand.vmem [shape: f32[1,128], index: 2, kind: input, shape index: {}]
  %s3 = inlined_call_operand.vmem [shape: f32[2], index: 3, kind: input, shape index: {}]
  %s4 = inlined_call_operand.vmem [shape: f32[2,128], index: 4, kind: input, shape index: {}]
  %s5 = inlined_call_operand.hbm [shape: f32[2,128], index: 5, kind: output, shape index: {0}]
  %s6 = inlined_call_operand.hbm [shape: f32[2,4], index: 6, kind: output, shape index: {1}]
  %7 = xla_tuple %s5, %s6
  %s8 = sld [smem:[#allocation0]]
  $region42: #{tpu_custom_call.1} parent=0
    _
  %s10 = ssub.s32 1, %s8
  %s11 = scalar_select 0, %s10, %s8
  $region1: #{tpu_custom_call.1} parent=0
    #allocation2 [shape = 'u8[512]{0}', space=smem, size = 0x200, scoped, tag = 'input window, operand 3, single buffered']
    #allocation3 [shape = 's32[1]{0}', space=sflag, size = 0x4, scoped, tag = 'scoped memory for tpu_custom_call.1']
    #allocation4 [shape = 's32[1]{0}', space=sflag, size = 0x4, scoped, tag = 'scoped memory for tpu_custom_call.1']
    #allocation5 [shape = 'u8[1024]{0}', space=vmem, size = 0x400, scoped, tag = 'output window, operand 0, single buffered']
    #allocation6 [shape = 'u8[1024]{0}', space=vmem, size = 0x400, scoped, tag = 'output window, operand 1, single buffered']
    #allocation7 [shape = 's32[1]{0}', space=sflag, size = 0x4, scoped, tag = 'scoped memory for tpu_custom_call.1']
    %12 = vsyncpa [#allocation4], 0
    %13 = vsyncpa [#allocation3], 0
    %14 = vsyncpa [#allocation7], 0
    // Predicated region
    $region2: #{tpu_custom_call.1} parent=1 // pred_check
      _
    $region3: #{tpu_custom_call.1} parent=1 // pred_check_branch
      %16 = sbr.rel (0) target = $region5
    $region4: #{tpu_custom_call.1} parent=1 // pred_region
      _
    $region5: #{tpu_custom_call.1} parent=1 // pred_fallthru
      _
    // Predicated region
    $region6: #{tpu_custom_call.1} parent=1 // pred_check
      _
    $region7: #{tpu_custom_call.1} parent=1 // pred_check_branch
      %18 = sbr.rel (0) target = $region9
    $region8: #{tpu_custom_call.1} parent=1 // pred_region
      _
    $region9: #{tpu_custom_call.1} parent=1 // pred_fallthru
      _
    // Predicated region
    $region10: #{tpu_custom_call.1} parent=1 // pred_check
      _
    $region11: #{tpu_custom_call.1} parent=1 // pred_check_branch
      %20 = sbr.rel (0) target = $region13
    $region12: #{tpu_custom_call.1} parent=1 // pred_region
      _
    $region13: #{tpu_custom_call.1} parent=1 // pred_fallthru
      _
    // Predicated region
    $region14: #{tpu_custom_call.1} parent=1 // pred_check
      _
    $region15: #{tpu_custom_call.1} parent=1 // pred_check_branch
      %22 = sbr.rel (0) target = $region17
    $region16: #{tpu_custom_call.1} parent=1 // pred_region
      %24 = vsyncadd [#allocation4], 0
      %s26 = sshll.u32 %s3, 4
      %s27 = int_to_ptr.vmem [resolvable:$true] %s26
      %29 = dma.vmem_to_smem %s27, 16, [#allocation2], [#allocation4]
    $region17: #{tpu_custom_call.1} parent=1 // pred_fallthru
      _
    // Predicated region
    $region18: #{tpu_custom_call.1} parent=1 // pred_check
      _
    $region19: #{tpu_custom_call.1} parent=1 // pred_check_branch
      %31 = sbr.rel (0) target = $region21
    $region20: #{tpu_custom_call.1} parent=1 // pred_region
      _
    $region21: #{tpu_custom_call.1} parent=1 // pred_fallthru
      _
    // Predicated region
    $region22: #{tpu_custom_call.1} parent=1 // pred_check
      _
    $region23: #{tpu_custom_call.1} parent=1 // pred_check_branch
      %33 = sbr.rel (0) target = $region25
    $region24: #{tpu_custom_call.1} parent=1 // pred_region
      %35 = dma.done [#allocation4], 16
    $region25: #{tpu_custom_call.1} parent=1 // pred_fallthru
      _
    %36 = sfence
    %v37 = vld [vmem:[%s4] sm:$0x3]
    %s38 = sld [smem:[#allocation2]]
    %s39 = sld [smem:[#allocation2 + $0x1]]
    %v40 = vld [vmem:[%s0] sm:$0xff]
    %v41 = vld [vmem:[%s0 + $0x8] sm:$0xff]
    %v42 = vld [vmem:[%s0 + $0x10] sm:$0xff]
    %v43 = vld [vmem:[%s0 + $0x18] sm:$0xff]
    %v44 = vld [vmem:[%s0 + $0x20] sm:$0xff]
    %v45 = vld [vmem:[%s0 + $0x28] sm:$0xff]
    %v46 = vld [vmem:[%s0 + $0x30] sm:$0xff]
    %v47 = vld [vmem:[%s0 + $0x38] sm:$0xff]
    %v48 = vld [vmem:[%s0 + $0x40] sm:$0xff]
    %v49 = vld [vmem:[%s0 + $0x48] sm:$0xff]
    %v50 = vld [vmem:[%s0 + $0x50] sm:$0xff]
    %v51 = vld [vmem:[%s0 + $0x58] sm:$0xff]
    %v52 = vld [vmem:[%s0 + $0x60] sm:$0xff]
    %v53 = vld [vmem:[%s0 + $0x68] sm:$0xff]
    %v54 = vld [vmem:[%s0 + $0x70] sm:$0xff]
    %v55 = vld [vmem:[%s0 + $0x78] sm:$0xff]
    %v56 = vstv %s38
    %57 = vmatpush.msra.mxu0 %v55
    %58 = vmatpush.msra.mxu0 %v54
    %59 = vmatpush.msra.mxu0 %v53
    %60 = vmatpush.msra.mxu0 %v52
    %61 = vmatpush.msra.mxu0 %v51
    %62 = vmatpush.msra.mxu0 %v50
    %63 = vmatpush.msra.mxu0 %v49
    %64 = vmatpush.msra.mxu0 %v48
    %65 = vmatpush.msra.mxu0 %v47
    %66 = vmatpush.msra.mxu0 %v46
    %67 = vmatpush.msra.mxu0 %v45
    %68 = vmatpush.msra.mxu0 %v44
    %69 = vmatpush.msra.mxu0 %v43
    %70 = vmatpush.msra.mxu0 %v42
    %71 = vmatpush.msra.mxu0 %v41
    %72 = vmatpush.msra.mxu0 %v40
    %73 = vmatmul.f32.gmra.mxu0 %v37
    %v74 = vpop.f32.mrf.mxu0
    %v75 = vadd.f32 %v56, %v74
    %76 = vdwg.mxu0
    %v77 = vtanh.pop %v75
    %v78 = vld [vmem:[%s1] sm:$0xf]
    %vm79 = vcmask 31744
    %v81 = vsel %vm79, %v77, 0
    %vm83 = vcmask 1043456
    %v85 = vsel %vm83, %v78, 0
    %87 = vmatpush.msra.mxu0 0.0
    %88 = vmatpush.msra.mxu0 0.0
    %89 = vmatpush.msra.mxu0 0.0
    %90 = vmatpush.msra.mxu0 0.0
    %91 = vmatpush.msra.mxu0 0.0
    %92 = vmatpush.msra.mxu0 0.0
    %93 = vmatpush.msra.mxu0 0.0
    %94 = vmatpush.msra.mxu0 0.0
    %95 = vmatpush.msra.mxu0 0.0
    %96 = vmatpush.msra.mxu0 0.0
    %97 = vmatpush.msra.mxu0 0.0
    %98 = vmatpush.msra.mxu0 0.0
    %99 = vmatpush.msra.mxu0 0.0
    %100 = vmatpush.msra.mxu0 0.0
    %101 = vmatpush.msra.mxu0 0.0
    %102 = vmatpush.msra.mxu0 %v85
    %103 = vmatmul.f32.gmra.mxu0 %v81
    %v104 = vpop.f32.mrf.mxu0
    %v105 = vadd.f32 0.0, %v104
    %106 = vdwg.mxu0
    %v107 = vld [vmem:[%s2] sm:$0x1]
    %v109 = vperm.slane %v107, 0
    %v111 = vmul.f32 %v109, %v105
    %v112 = vadd.f32 %v37, %v111
    %113 = vst [vmem:[#allocation5] sm:$0x3] %v112
    %v114 = vmul.f32 %v77, %v77
    %v115 = vsub.f32 1.0, %v114
    %v116 = vstv %s39
    %v117 = vmul.f32 %v115, %v116
    %v118 = vadd.f32 %v117, 1.0
    %v119 = vand.u32 2147483647, %v118
    %v120 = vadd.f32 %v119, 1e-08
    %v121 = vlog2.pop %v120
    %v122 = vmul.f32 %v121, 0.6931472
    %vm123 = vcmask 25600
    %124 = vst.msk [vmem:[#allocation6] sm:$0x3] %vm123, %v122
    // Predicated region
    $region26: #{tpu_custom_call.1} parent=1 // pred_check
      _
    $region27: #{tpu_custom_call.1} parent=1 // pred_check_branch
      %126 = sbr.rel (0) target = $region29
    $region28: #{tpu_custom_call.1} parent=1 // pred_region
      %128 = vsyncadd [#allocation3], 0
      %s130 = sshll.u32 [#allocation5], 4
      %s131 = int_to_ptr.vmem [resolvable:$true] %s130
      %s132 = sshll.u32 %s5, 4
      %s133 = int_to_ptr.hbm [resolvable:$true] %s132
      %135 = dma.vmem_to_hbm [thread:$0]  %s131, 32, %s133, [#allocation3]
    $region29: #{tpu_custom_call.1} parent=1 // pred_fallthru
      _
    // Predicated region
    $region30: #{tpu_custom_call.1} parent=1 // pred_check
      _
    $region31: #{tpu_custom_call.1} parent=1 // pred_check_branch
      %137 = sbr.rel (0) target = $region33
    $region32: #{tpu_custom_call.1} parent=1 // pred_region
      %139 = vsyncadd [#allocation7], 0
      %s141 = sshll.u32 [#allocation6], 4
      %s142 = int_to_ptr.vmem [resolvable:$true] %s141
      %s143 = sshll.u32 %s6, 4
      %s144 = int_to_ptr.hbm [resolvable:$true] %s143
      %146 = dma.vmem_to_hbm [thread:$0]  %s142, 32, %s144, [#allocation7]
    $region33: #{tpu_custom_call.1} parent=1 // pred_fallthru
      _
    // Predicated region
    $region34: #{tpu_custom_call.1} parent=1 // pred_check
      _
    $region35: #{tpu_custom_call.1} parent=1 // pred_check_branch
      %148 = sbr.rel (0) target = $region37
    $region36: #{tpu_custom_call.1} parent=1 // pred_region
      %150 = dma.done [#allocation3], 32
    $region37: #{tpu_custom_call.1} parent=1 // pred_fallthru
      _
    // Predicated region
    $region38: #{tpu_custom_call.1} parent=1 // pred_check
      _
    $region39: #{tpu_custom_call.1} parent=1 // pred_check_branch
      %152 = sbr.rel (0) target = $region41
    $region40: #{tpu_custom_call.1} parent=1 // pred_region
      %154 = dma.done [#allocation7], 32
    $region41: #{tpu_custom_call.1} parent=1 // pred_fallthru
      _
    %155 = vsyncpa [#allocation3], 1
    %156 = vsyncpa [#allocation7], 1
    %157 = vsyncpa [#allocation4], 1

</llo_original>
